<compile_context>
chip_gen: v7x
topology: tpu7x:2x2x1
jax: 0.10.0
libtpu: 0.0.40
codegen_flags: <defaults>
</compile_context>

<pallas_src>
import jax
import jax.numpy as jnp
from jax import lax
from jax.experimental import pallas as pl
from jax.experimental.pallas import tpu as pltpu

# ---- static configuration -------------------------------------------------
B = 2            # batch
L = 8            # sequence length
VOCAB = 32       # vocab size
E = 16           # embed_dim
F1, F2 = 32, 32  # num_filters
K1, K2 = 3, 6    # kernel_sizes
S1, S2 = 1, 1    # strides
Z = 8            # z_dim
L1 = (L - K1) // S1 + 1     # = 6, after conv_layers[0]
L2 = (L1 - K2) // S2 + 1    # = 1, after last_conv -> flatten gives (B, F2)
assert L2 == 1 and L1 == K2


# ---- Pallas kernel: embedding + conv stack + fused heads --------------------
def encoder_kernel(tok_ref, emb_ref, w1_ref, b1_ref, w2_ref, b2_ref,
                   wh_ref, bh_ref, out_ref):
    # Embedding lookup as a one-hot matmul on the MXU (gather-free).
    tok = tok_ref[...]                                          # (B*L, 1) int32
    iota = lax.broadcasted_iota(jnp.int32, (B * L, VOCAB), 1)   # (B*L, VOCAB)
    onehot = jnp.where(iota == tok, 1.0, 0.0)                   # f32 one-hot
    x = jnp.dot(onehot, emb_ref[...],
                preferred_element_type=jnp.float32)             # (B*L, E)
    x3 = x.reshape(B, L, E)                                     # (B, L, E)

    # Conv1d #0 (k=K1, stride=1) as a single im2col matmul:
    #   xc[b, t, k*E + e] = x[b, t+k, e];  h = relu(xc @ W1c + b1)
    xc = jnp.concatenate([x3[:, k:k + L1, :] for k in range(K1)],
                         axis=-1)                               # (B, L1, K1*E)
    h = jnp.einsum('bli,if->blf', xc, w1_ref[...],
                   preferred_element_type=jnp.float32)          # (B, L1, F1)
    h = jnp.maximum(h + b1_ref[...], 0.0)                       # ReLU (reg layer)

    # last_conv (k=K2 == L1, output length 1) as a single matmul over the
    # full receptive field:  g_in[b, t*F1 + f1] = h[b, t, f1]
    g_in = jnp.concatenate([h[:, t, :] for t in range(K2)],
                           axis=-1)                             # (B, K2*F1)
    g = jnp.dot(g_in, w2_ref[...],
                preferred_element_type=jnp.float32) + b2_ref[...]   # (B, F2)

    # Fused mean/logv heads: one (F2, 2Z) matmul, one (B, 2Z) store.
    out_ref[...] = (jnp.dot(g, wh_ref[...],
                            preferred_element_type=jnp.float32)
                    + bh_ref[...])                              # (B, 2Z)


# ---- one-time parameter preparation (hoisted out of the per-call path) ------
def prepare_encoder_params(params):
    emb_tbl, w1, b1, w2, b2, wm, bm, wv, bv = params
    # im2col layouts: w1c[k*E + e, f] = w1[f, e, k]; w2c[k*F1 + f1, f2] = w2[f2, f1, k]
    w1c = jnp.transpose(w1, (2, 1, 0)).reshape(K1 * E, F1)
    w2c = jnp.transpose(w2, (2, 1, 0)).reshape(K2 * F1, F2)
    wh = jnp.concatenate([wm.T, wv.T], axis=1)                  # (F2, 2Z)
    bh = jnp.concatenate([bm, bv]).reshape(1, 2 * Z)            # (1, 2Z)
    return (emb_tbl, w1c, b1.reshape(1, F1), w2c, b2.reshape(1, F2), wh, bh)


# ---- wrapper ----------------------------------------------------------------
@jax.jit
def encoder_forward(tokens, kparams):
    emb_tbl, w1c, b1r, w2c, b2r, wh, bh = kparams
    vmem = pl.BlockSpec(memory_space=pltpu.MemorySpace.VMEM)
    out = pl.pallas_call(
        encoder_kernel,
        out_shape=jax.ShapeDtypeStruct((B, 2 * Z), jnp.float32),
        in_specs=[vmem] * 8,
        out_specs=vmem,
    )(tokens.reshape(B * L, 1).astype(jnp.int32),
      emb_tbl, w1c, b1r, w2c, b2r, wh, bh)
    mean = out[:, :Z]
    logv = out[:, Z:]
    # PyTorch forward returns (mean, logv, mean); z is sampled then discarded.
    # TODO(synk): torch.randn_like-based z is not part of the returned values,
    # so it is intentionally not reproduced here.
    return mean, logv, mean


# ---- pure-JAX reference (lax.conv, PyTorch NCW semantics) -------------------
def encoder_ref(tokens, params):
    emb_tbl, w1, b1, w2, b2, wm, bm, wv, bv = params
    x = jnp.take(emb_tbl, tokens, axis=0)            # (B, L, E)
    x = jnp.transpose(x, (0, 2, 1))                  # (B, E, L)  == NCW
    dn = ('NCH', 'OIH', 'NCH')
    h = lax.conv_general_dilated(x, w1, (S1,), 'VALID', dimension_numbers=dn)
    h = jax.nn.relu(h + b1[None, :, None])
    g = lax.conv_general_dilated(h, w2, (S2,), 'VALID', dimension_numbers=dn)
    g = g + b2[None, :, None]
    g = g.reshape(B, -1)
    mean = g @ wm.T + bm
    logv = g @ wv.T + bv
    return mean, logv, mean


# ---- deterministic parameter init ------------------------------------------
def make_params(key):
    ks = jax.random.split(key, 9)
    emb_tbl = jax.random.uniform(ks[0], (VOCAB, E), jnp.float32, -0.001, 0.001)
    w1 = jax.random.normal(ks[1], (F1, E, K1), jnp.float32) * 0.1
    b1 = jax.random.normal(ks[2], (F1,), jnp.float32) * 0.01
    w2 = jax.random.normal(ks[3], (F2, F1, K2), jnp.float32) * 0.1
    b2 = jax.random.normal(ks[4], (F2,), jnp.float32) * 0.01
    wm = jax.random.normal(ks[5], (Z, F2), jnp.float32) * 0.1
    bm = jnp.full((Z,), 0.01, jnp.float32)
    wv = jax.random.normal(ks[6], (Z, F2), jnp.float32) * 0.1
    bv = jnp.full((Z,), 0.01, jnp.float32)
    return (emb_tbl, w1, b1, w2, b2, wm, bm, wv, bv)


if __name__ == "__main__":
    key = jax.random.PRNGKey(0)
    pkey, tkey = jax.random.split(key)
    params = make_params(pkey)
    tokens = jax.random.randint(tkey, (B, L), 0, VOCAB, dtype=jnp.int32)

    kparams = prepare_encoder_params(params)         # one-time weight prep

    mean, logv, z = jax.block_until_ready(encoder_forward(tokens, kparams))
    mean_r, logv_r, z_r = jax.block_until_ready(encoder_ref(tokens, params))

    assert mean.shape == (B, Z) and logv.shape == (B, Z)
    assert jnp.allclose(mean, mean_r, atol=1e-4, rtol=1e-4)
    assert jnp.allclose(logv, logv_r, atol=1e-4, rtol=1e-4)
    assert jnp.allclose(z, z_r, atol=1e-4, rtol=1e-4)
    print("KERNEL_OK")
</pallas_src>

<mosaic_0001>
module attributes {stable_mosaic.version = 11 : i64} {
  func.func @encoder_kernel(%arg0: memref<16x1xi32, #tpu.memory_space<vmem>>, %arg1: memref<32x16xf32, #tpu.memory_space<vmem>>, %arg2: memref<48x32xf32, #tpu.memory_space<vmem>>, %arg3: memref<1x32xf32, #tpu.memory_space<vmem>>, %arg4: memref<192x32xf32, #tpu.memory_space<vmem>>, %arg5: memref<1x32xf32, #tpu.memory_space<vmem>>, %arg6: memref<32x16xf32, #tpu.memory_space<vmem>>, %arg7: memref<1x16xf32, #tpu.memory_space<vmem>>, %arg8: memref<2x16xf32, #tpu.memory_space<vmem>>) attributes {dimension_semantics = [], scalar_prefetch = 0 : i64, scratch_operands = 0 : i64, tpu.core_type = #tpu.core_type<tc>} {
    %c0 = arith.constant 0 : index
    %c0_0 = arith.constant 0 : index
    %0 = vector.load %arg0[%c0, %c0_0] : memref<16x1xi32, #tpu.memory_space<vmem>>, vector<16x1xi32>
    %1 = tpu.iota {dimensions = array<i32: 1>} : vector<16x32xi32>
    %2 = vector.broadcast %0 : vector<16x1xi32> to vector<16x32xi32>
    %3 = arith.cmpi eq, %1, %2 : vector<16x32xi32>
    %cst = arith.constant 1.000000e+00 : f32
    %cst_1 = arith.constant 0.000000e+00 : f32
    %4 = vector.broadcast %cst : f32 to vector<16x32xf32>
    %5 = vector.broadcast %cst_1 : f32 to vector<16x32xf32>
    %6 = arith.select %3, %4, %5 : vector<16x32xi1>, vector<16x32xf32>
    %c0_2 = arith.constant 0 : index
    %c0_3 = arith.constant 0 : index
    %7 = vector.load %arg1[%c0_2, %c0_3] : memref<32x16xf32, #tpu.memory_space<vmem>>, vector<32x16xf32>
    %cst_4 = arith.constant dense<0.000000e+00> : vector<16x16xf32>
    %8 = tpu.matmul %6, %7, %cst_4 {dimension_numbers = #tpu.dot_dimension_numbers<[1], [0], [0], [1], [0, 0, 1, 1], [], []>} : vector<16x32xf32>, vector<32x16xf32>, vector<16x16xf32> -> vector<16x16xf32>
    %9 = vector.shape_cast %8 : vector<16x16xf32> to vector<2x8x16xf32>
    %10 = vector.extract_strided_slice %9 {offsets = [0, 0, 0], sizes = [2, 6, 16], strides = [1, 1, 1]} : vector<2x8x16xf32> to vector<2x6x16xf32>
    %11 = vector.extract_strided_slice %9 {offsets = [0, 1, 0], sizes = [2, 6, 16], strides = [1, 1, 1]} : vector<2x8x16xf32> to vector<2x6x16xf32>
    %12 = vector.extract_strided_slice %9 {offsets = [0, 2, 0], sizes = [2, 6, 16], strides = [1, 1, 1]} : vector<2x8x16xf32> to vector<2x6x16xf32>
    %13 = tpu.concatenate %10, %11, %12 in 2 : vector<2x6x16xf32>, vector<2x6x16xf32>, vector<2x6x16xf32> -> vector<2x6x48xf32>
    %c0_5 = arith.constant 0 : index
    %c0_6 = arith.constant 0 : index
    %14 = vector.load %arg2[%c0_5, %c0_6] : memref<48x32xf32, #tpu.memory_space<vmem>>, vector<48x32xf32>
    "tpu.trace_start"() <{level = 10 : i32, message = "bli,if->blf"}> : () -> ()
    %cst_7 = arith.constant dense<0.000000e+00> : vector<2x6x32xf32>
    %15 = tpu.matmul %13, %14, %cst_7 {dimension_numbers = #tpu.dot_dimension_numbers<[2], [0], [0, 1], [1], [0, 0, 0, 1, 1, 1], [], []>} : vector<2x6x48xf32>, vector<48x32xf32>, vector<2x6x32xf32> -> vector<2x6x32xf32>
    "tpu.trace_stop"() : () -> ()
    %c0_8 = arith.constant 0 : index
    %c0_9 = arith.constant 0 : index
    %16 = vector.load %arg3[%c0_8, %c0_9] : memref<1x32xf32, #tpu.memory_space<vmem>>, vector<1x32xf32>
    %17 = vector.shape_cast %16 : vector<1x32xf32> to vector<1x1x32xf32>
    %18 = vector.broadcast %17 : vector<1x1x32xf32> to vector<2x6x32xf32>
    %19 = arith.addf %15, %18 : vector<2x6x32xf32>
    %cst_10 = arith.constant 0.000000e+00 : f32
    %20 = vector.broadcast %cst_10 : f32 to vector<2x6x32xf32>
    %21 = arith.maximumf %19, %20 : vector<2x6x32xf32>
    %22 = vector.extract_strided_slice %21 {offsets = [0, 0, 0], sizes = [2, 1, 32], strides = [1, 1, 1]} : vector<2x6x32xf32> to vector<2x1x32xf32>
    %23 = vector.shape_cast %22 : vector<2x1x32xf32> to vector<2x32xf32>
    %24 = vector.extract_strided_slice %21 {offsets = [0, 1, 0], sizes = [2, 1, 32], strides = [1, 1, 1]} : vector<2x6x32xf32> to vector<2x1x32xf32>
    %25 = vector.shape_cast %24 : vector<2x1x32xf32> to vector<2x32xf32>
    %26 = vector.extract_strided_slice %21 {offsets = [0, 2, 0], sizes = [2, 1, 32], strides = [1, 1, 1]} : vector<2x6x32xf32> to vector<2x1x32xf32>
    %27 = vector.shape_cast %26 : vector<2x1x32xf32> to vector<2x32xf32>
    %28 = vector.extract_strided_slice %21 {offsets = [0, 3, 0], sizes = [2, 1, 32], strides = [1, 1, 1]} : vector<2x6x32xf32> to vector<2x1x32xf32>
    %29 = vector.shape_cast %28 : vector<2x1x32xf32> to vector<2x32xf32>
    %30 = vector.extract_strided_slice %21 {offsets = [0, 4, 0], sizes = [2, 1, 32], strides = [1, 1, 1]} : vector<2x6x32xf32> to vector<2x1x32xf32>
    %31 = vector.shape_cast %30 : vector<2x1x32xf32> to vector<2x32xf32>
    %32 = vector.extract_strided_slice %21 {offsets = [0, 5, 0], sizes = [2, 1, 32], strides = [1, 1, 1]} : vector<2x6x32xf32> to vector<2x1x32xf32>
    %33 = vector.shape_cast %32 : vector<2x1x32xf32> to vector<2x32xf32>
    %34 = tpu.concatenate %23, %25, %27, %29, %31, %33 in 1 : vector<2x32xf32>, vector<2x32xf32>, vector<2x32xf32>, vector<2x32xf32>, vector<2x32xf32>, vector<2x32xf32> -> vector<2x192xf32>
    %c0_11 = arith.constant 0 : index
    %c0_12 = arith.constant 0 : index
    %35 = vector.load %arg4[%c0_11, %c0_12] : memref<192x32xf32, #tpu.memory_space<vmem>>, vector<192x32xf32>
    %cst_13 = arith.constant dense<0.000000e+00> : vector<2x32xf32>
    %36 = tpu.matmul %34, %35, %cst_13 {dimension_numbers = #tpu.dot_dimension_numbers<[1], [0], [0], [1], [0, 0, 1, 1], [], []>} : vector<2x192xf32>, vector<192x32xf32>, vector<2x32xf32> -> vector<2x32xf32>
    %c0_14 = arith.constant 0 : index
    %c0_15 = arith.constant 0 : index
    %37 = vector.load %arg5[%c0_14, %c0_15] : memref<1x32xf32, #tpu.memory_space<vmem>>, vector<1x32xf32>
    %38 = vector.broadcast %37 : vector<1x32xf32> to vector<2x32xf32>
    %39 = arith.addf %36, %38 : vector<2x32xf32>
    %c0_16 = arith.constant 0 : index
    %c0_17 = arith.constant 0 : index
    %40 = vector.load %arg6[%c0_16, %c0_17] : memref<32x16xf32, #tpu.memory_space<vmem>>, vector<32x16xf32>
    %cst_18 = arith.constant dense<0.000000e+00> : vector<2x16xf32>
    %41 = tpu.matmul %39, %40, %cst_18 {dimension_numbers = #tpu.dot_dimension_numbers<[1], [0], [0], [1], [0, 0, 1, 1], [], []>} : vector<2x32xf32>, vector<32x16xf32>, vector<2x16xf32> -> vector<2x16xf32>
    %c0_19 = arith.constant 0 : index
    %c0_20 = arith.constant 0 : index
    %42 = vector.load %arg7[%c0_19, %c0_20] : memref<1x16xf32, #tpu.memory_space<vmem>>, vector<1x16xf32>
    %43 = vector.broadcast %42 : vector<1x16xf32> to vector<2x16xf32>
    %44 = arith.addf %41, %43 : vector<2x16xf32>
    %c0_21 = arith.constant 0 : index
    %c0_22 = arith.constant 0 : index
    %45 = vector.load %arg8[%c0_21, %c0_22] : memref<2x16xf32, #tpu.memory_space<vmem>>, vector<2x16xf32>
    tpu.vector_store %arg8[%c0_21, %c0_22], %44 {strides = array<i32>} : memref<2x16xf32, #tpu.memory_space<vmem>>, vector<2x16xf32>,
    return
  }
}

</mosaic_0001>

<llo_original>
// kernel: encoder_forward.1
$region0: #{encoder_forward.1}
  #allocation0 [shape = 'u32[]', space=smem, size = 0x4, offset = 0x4, fixed_abs, tag = 'smem constant byte address 0x4 - core index']
  #allocation1 [shape = 'u32[144,128]{1,0:T(1,128)}', space=vmem, size = 0x12000, scoped, tag = 'internal scratch']
  %s0 = inlined_call_operand.vmem [shape: s32[16,1], index: 0, kind: input, shape index: {}]
  %s1 = inlined_call_operand.vmem [shape: f32[32,16], index: 1, kind: input, shape index: {}]
  %s2 = inlined_call_operand.vmem [shape: f32[48,32], index: 2, kind: input, shape index: {}]
  %s3 = inlined_call_operand.vmem [shape: f32[1,32], index: 3, kind: input, shape index: {}]
  %s4 = inlined_call_operand.vmem [shape: f32[192,32], index: 4, kind: input, shape index: {}]
  %s5 = inlined_call_operand.vmem [shape: f32[1,32], index: 5, kind: input, shape index: {}]
  %s6 = inlined_call_operand.vmem [shape: f32[32,16], index: 6, kind: input, shape index: {}]
  %s7 = inlined_call_operand.vmem [shape: f32[1,16], index: 7, kind: input, shape index: {}]
  %s8 = inlined_call_operand.vmem [shape: f32[2,16], index: 8, kind: output, shape index: {}]
  %s9 = sld [smem:[#allocation0]]
  $region42: #{encoder_forward.1} parent=0
    _
  %s11 = ssub.s32 1, %s9
  %s12 = scalar_select 0, %s11, %s9
  // Predicated region
  $region2: #{encoder_forward.1} parent=0 // pred_check
    _
  $region3: #{encoder_forward.1} parent=0 // pred_check_branch
    %14 = sbr.rel (0) target = $region5
  $region4: #{encoder_forward.1} parent=0 // pred_region
    _
  $region5: #{encoder_forward.1} parent=0 // pred_fallthru
    _
  // Predicated region
  $region6: #{encoder_forward.1} parent=0 // pred_check
    _
  $region7: #{encoder_forward.1} parent=0 // pred_check_branch
    %16 = sbr.rel (0) target = $region9
  $region8: #{encoder_forward.1} parent=0 // pred_region
    _
  $region9: #{encoder_forward.1} parent=0 // pred_fallthru
    _
  // Predicated region
  $region10: #{encoder_forward.1} parent=0 // pred_check
    _
  $region11: #{encoder_forward.1} parent=0 // pred_check_branch
    %18 = sbr.rel (0) target = $region13
  $region12: #{encoder_forward.1} parent=0 // pred_region
    _
  $region13: #{encoder_forward.1} parent=0 // pred_fallthru
    _
  // Predicated region
  $region14: #{encoder_forward.1} parent=0 // pred_check
    _
  $region15: #{encoder_forward.1} parent=0 // pred_check_branch
    %20 = sbr.rel (0) target = $region17
  $region16: #{encoder_forward.1} parent=0 // pred_region
    _
  $region17: #{encoder_forward.1} parent=0 // pred_fallthru
    _
  // Predicated region
  $region18: #{encoder_forward.1} parent=0 // pred_check
    _
  $region19: #{encoder_forward.1} parent=0 // pred_check_branch
    %22 = sbr.rel (0) target = $region21
  $region20: #{encoder_forward.1} parent=0 // pred_region
    _
  $region21: #{encoder_forward.1} parent=0 // pred_fallthru
    _
  // Predicated region
  $region22: #{encoder_forward.1} parent=0 // pred_check
    _
  $region23: #{encoder_forward.1} parent=0 // pred_check_branch
    %24 = sbr.rel (0) target = $region25
  $region24: #{encoder_forward.1} parent=0 // pred_region
    _
  $region25: #{encoder_forward.1} parent=0 // pred_fallthru
    _
  // Predicated region
  $region26: #{encoder_forward.1} parent=0 // pred_check
    _
  $region27: #{encoder_forward.1} parent=0 // pred_check_branch
    %26 = sbr.rel (0) target = $region29
  $region28: #{encoder_forward.1} parent=0 // pred_region
    _
  $region29: #{encoder_forward.1} parent=0 // pred_fallthru
    _
  // Predicated region
  $region30: #{encoder_forward.1} parent=0 // pred_check
    _
  $region31: #{encoder_forward.1} parent=0 // pred_check_branch
    %28 = sbr.rel (0) target = $region33
  $region32: #{encoder_forward.1} parent=0 // pred_region
    _
  $region33: #{encoder_forward.1} parent=0 // pred_fallthru
    _
  %v29 = vld [vmem:[%s0] sm:$0xff]
  %v30 = vld [vmem:[%s0 + $0x8] sm:$0xff]
  %v31 = vlaneseq
  %v32 = vand.u32 %v31, 127
  %33 = vset.pattern.permute.xlu0 0
  %34 = vperm.xlu0 %33, %v29
  %v35 = vpop.permute.xlu0 %34
  %36 = vset.pattern.permute.xlu0 0
  %37 = vperm.xlu0 %36, %v30
  %v38 = vpop.permute.xlu0 %37
  %vm39 = vcmp.eq.s32.totalorder %v32, %v35
  %vm40 = vcmp.eq.s32.totalorder %v32, %v38
  %v41 = vsel %vm39, 1.0, 0.0
  %v42 = vsel %vm40, 1.0, 0.0
  %v43 = vld [vmem:[%s1] sm:$0xff]
  %v44 = vld [vmem:[%s1 + $0x8] sm:$0xff]
  %v45 = vld [vmem:[%s1 + $0x10] sm:$0xff]
  %v46 = vld [vmem:[%s1 + $0x18] sm:$0xff]
  %vm47 = vcmask 261120
  %v49 = vsel %vm47, %v41, 0
  %v52 = vsel %vm47, %v42, 0
  %54 = vmatprep.subr.mxu0 0.0
  %55 = vmatpush1.msra.mxu0 %v43
  %56 = vmatprep.subr.mxu0 0.0
  %57 = vmatpush1.msra.mxu0 %v44
  %58 = vmatprep.subr.mxu0 0.0
  %59 = vmatpush1.msra.mxu0 %v45
  %60 = vmatprep.subr.mxu0 0.0
  %61 = vmatpush1.msra.mxu0 %v46
  %62 = vmatprep.subr.mxu0 0.0
  %63 = vmatpush1.msra.mxu0 0.0
  %64 = vmatprep.subr.mxu0 0.0
  %65 = vmatpush1.msra.mxu0 0.0
  %66 = vmatprep.subr.mxu0 0.0
  %67 = vmatpush1.msra.mxu0 0.0
  %68 = vmatprep.subr.mxu0 0.0
  %69 = vmatpush1.msra.mxu0 0.0
  %70 = vmatprep.subr.mxu0 0.0
  %71 = vmatpush1.msra.mxu0 0.0
  %72 = vmatprep.subr.mxu0 0.0
  %73 = vmatpush1.msra.mxu0 0.0
  %74 = vmatprep.subr.mxu0 0.0
  %75 = vmatpush1.msra.mxu0 0.0
  %76 = vmatprep.subr.mxu0 0.0
  %77 = vmatpush1.msra.mxu0 0.0
  %78 = vmatprep.subr.mxu0 0.0
  %79 = vmatpush1.msra.mxu0 0.0
  %80 = vmatprep.subr.mxu0 0.0
  %81 = vmatpush1.msra.mxu0 0.0
  %82 = vmatprep.subr.mxu0 0.0
  %83 = vmatpush1.msra.mxu0 0.0
  %84 = vmatprep.subr.mxu0 0.0
  %85 = vmatpush1.msra.mxu0 0.0
  %86 = vmatprep.subr.mxu0 0.0
  %87 = vmatpush1.msra.mxu0 0.0
  %88 = vmatprep.subr.mxu0 0.0
  %89 = vmatpush1.msra.mxu0 0.0
  %90 = vmatprep.subr.mxu0 0.0
  %91 = vmatpush1.msra.mxu0 0.0
  %92 = vmatprep.subr.mxu0 0.0
  %93 = vmatpush1.msra.mxu0 0.0
  %94 = vmatprep.subr.mxu0 0.0
  %95 = vmatpush1.msra.mxu0 0.0
  %96 = vmatprep.subr.mxu0 0.0
  %97 = vmatpush1.msra.mxu0 0.0
  %98 = vmatprep.subr.mxu0 0.0
  %99 = vmatpush1.msra.mxu0 0.0
  %100 = vmatprep.subr.mxu0 0.0
  %101 = vmatpush1.msra.mxu0 0.0
  %102 = vmatprep.subr.mxu0 0.0
  %103 = vmatpush1.msra.mxu0 0.0
  %104 = vmatprep.subr.mxu0 0.0
  %105 = vmatpush1.msra.mxu0 0.0
  %106 = vmatprep.subr.mxu0 0.0
  %107 = vmatpush1.msra.mxu0 0.0
  %108 = vmatprep.subr.mxu0 0.0
  %109 = vmatpush1.msra.mxu0 0.0
  %110 = vmatprep.subr.mxu0 0.0
  %111 = vmatpush1.msra.mxu0 0.0
  %112 = vmatprep.subr.mxu0 0.0
  %113 = vmatpush1.msra.mxu0 0.0
  %114 = vmatprep.subr.mxu0 0.0
  %115 = vmatpush1.msra.mxu0 0.0
  %116 = vmatprep.subr.mxu0 0.0
  %117 = vmatpush1.msra.mxu0 0.0
  %118 = vmatprep.mubr.f32.mxu0 0.0
  %119 = vmatmul.mubr.f32.gmra.mrb[0].mxu0 %v49
  %v120 = vpop.f32.mrb[0].mxu0
  %v121 = vadd.f32 0.0, %v120
  %v122 = vpop.f32.mrb[0].mxu0
  %123 = vmatprep.mubr.f32.mxu0 0.0
  %124 = vmatmul.mubr.f32.gmra.mrb[0].mxu0 %v52
  %v125 = vpop.f32.mrb[0].mxu0
  %v126 = vadd.f32 0.0, %v125
  %v127 = vpop.f32.mrb[0].mxu0
  %128 = vdwg.mxu0
  %v131 = vrot.slane %v121, 1
  %v132 = vrot.slane %v126, 1
  %133 = vrot.lane.b32.xlu0 %v131, 16
  %v134 = vpop.permute.xlu0 %133
  %135 = vrot.lane.b32.xlu0 %v132, 16
  %v136 = vpop.permute.xlu0 %135
  %v139 = vrot.slane %v121, 2
  %v140 = vrot.slane %v126, 2
  %141 = vrot.lane.b32.xlu0 %v139, 32
  %v142 = vpop.permute.xlu0 %141
  %143 = vrot.lane.b32.xlu0 %v140, 32
  %v144 = vpop.permute.xlu0 %143
  %vm147 = vcmask 130048
  %v148 = vsel %vm147, %v121, %v134
  %v149 = vsel %vm147, %v126, %v136
  %v150 = vsel %vm47, %v148, %v142
  %v151 = vsel %vm47, %v149, %v144
  %v152 = vld [vmem:[%s2] sm:$0xff]
  %v153 = vld [vmem:[%s2 + $0x8] sm:$0xff]
  %v154 = vld [vmem:[%s2 + $0x10] sm:$0xff]
  %v155 = vld [vmem:[%s2 + $0x18] sm:$0xff]
  %v156 = vld [vmem:[%s2 + $0x20] sm:$0xff]
  %v157 = vld [vmem:[%s2 + $0x28] sm:$0xff]
  %v158 = vld [vmem:[%s3] sm:$0x1]
  %v160 = vlaneseq
  %v161 = vshrl.u32 %v160, 7
  %v162 = vsub.s32 0, %v161
  %v163 = vrot.slane %v158, %v162
  %v166 = vcombine.high %v150, %v150
  %v168 = vunpack.c.l.s4 1983009808
  %v169 = vunpack.c.0.s8 %v168
  %v170 = vlaneseq
  %v171 = vshrl.u32 %v170, 7
  %v172 = vsub.s32 %v169, %v171
  %v173 = vrot.slane %v150, %v172
  %v175 = vunpack.c.l.s4 1983009808
  %v176 = vunpack.c.0.s8 %v175
  %v177 = vlaneseq
  %v178 = vshrl.u32 %v177, 7
  %v179 = vsub.s32 %v176, %v178
  %v180 = vrot.slane %v166, %v179
  %v181 = vcombine.high %v173, %v173
  %v182 = vcombine.high %v151, %v151
  %v184 = vunpack.c.l.s4 1983009808
  %v185 = vunpack.c.0.s8 %v184
  %v186 = vlaneseq
  %v187 = vshrl.u32 %v186, 7
  %v188 = vsub.s32 %v185, %v187
  %v189 = vrot.slane %v151, %v188
  %v191 = vunpack.c.l.s4 1983009808
  %v192 = vunpack.c.0.s8 %v191
  %v193 = vlaneseq
  %v194 = vshrl.u32 %v193, 7
  %v195 = vsub.s32 %v192, %v194
  %v196 = vrot.slane %v182, %v195
  %v197 = vcombine.high %v189, %v189
  %v198 = vcombine.high %v163, %v163
  %v200 = vunpack.c.l.s4 1983009808
  %v201 = vunpack.c.0.s8 %v200
  %v202 = vlaneseq
  %v203 = vshrl.u32 %v202, 7
  %v204 = vsub.s32 %v201, %v203
  %v205 = vrot.slane %v163, %v204
  %v207 = vunpack.c.l.s4 1983009808
  %v208 = vunpack.c.0.s8 %v207
  %v209 = vlaneseq
  %v210 = vshrl.u32 %v209, 7
  %v211 = vsub.s32 %v208, %v210
  %v212 = vrot.slane %v198, %v211
  %v213 = vcombine.high %v205, %v205
  %v214 = vcombine.low %v173, %v181
  %v215 = vcombine.low %v180, %v189
  %v217 = vunpack.c.l.s4 1983009808
  %v218 = vunpack.c.0.s8 %v217
  %v219 = vlaneseq
  %v220 = vshrl.u32 %v219, 7
  %v221 = vsub.s32 %v218, %v220
  %v222 = vrot.slane %v214, %v221
  %v224 = vunpack.c.l.s4 1983009808
  %v225 = vunpack.c.0.s8 %v224
  %v226 = vlaneseq
  %v227 = vshrl.u32 %v226, 7
  %v228 = vsub.s32 %v225, %v227
  %v229 = vrot.slane %v215, %v228
  %v230 = vcombine.low %v222, %v229
  %v231 = vcombine.low %v197, %v196
  %v233 = vunpack.c.l.s4 1983009808
  %v234 = vunpack.c.0.s8 %v233
  %v235 = vlaneseq
  %v236 = vshrl.u32 %v235, 7
  %v237 = vsub.s32 %v234, %v236
  %v238 = vrot.slane %v231, %v237
  %v239 = vcombine.low %v205, %v213
  %v240 = vcombine.low %v212, %v205
  %v242 = vunpack.c.l.s4 1983009808
  %v243 = vunpack.c.0.s8 %v242
  %v244 = vlaneseq
  %v245 = vshrl.u32 %v244, 7
  %v246 = vsub.s32 %v243, %v245
  %v247 = vrot.slane %v239, %v246
  %v249 = vunpack.c.l.s4 1983009808
  %v250 = vunpack.c.0.s8 %v249
  %v251 = vlaneseq
  %v252 = vshrl.u32 %v251, 7
  %v253 = vsub.s32 %v250, %v252
  %v254 = vrot.slane %v240, %v253
  %v255 = vcombine.low %v247, %v254
  %v256 = vcombine.low %v213, %v212
  %v258 = vunpack.c.l.s4 1983009808
  %v259 = vunpack.c.0.s8 %v258
  %v260 = vlaneseq
  %v261 = vshrl.u32 %v260, 7
  %v262 = vsub.s32 %v259, %v261
  %v263 = vrot.slane %v256, %v262
  %vm266 = vcmask 392192
  %v267 = vsel %vm266, %v230, 0
  %v269 = vsel %vm266, %v238, 0
  %271 = vmatprep.subr.mxu0 0.0
  %272 = vmatpush1.msra.mxu0 %v152
  %273 = vmatprep.subr.mxu0 0.0
  %274 = vmatpush1.msra.mxu0 %v153
  %275 = vmatprep.subr.mxu0 0.0
  %276 = vmatpush1.msra.mxu0 %v154
  %277 = vmatprep.subr.mxu0 0.0
  %278 = vmatpush1.msra.mxu0 %v155
  %279 = vmatprep.subr.mxu0 0.0
  %280 = vmatpush1.msra.mxu0 %v156
  %281 = vmatprep.subr.mxu0 0.0
  %282 = vmatpush1.msra.mxu0 %v157
  %283 = vmatprep.subr.mxu0 0.0
  %284 = vmatpush1.msra.mxu0 0.0
  %285 = vmatprep.subr.mxu0 0.0
  %286 = vmatpush1.msra.mxu0 0.0
  %287 = vmatprep.subr.mxu0 0.0
  %288 = vmatpush1.msra.mxu0 0.0
  %289 = vmatprep.subr.mxu0 0.0
  %290 = vmatpush1.msra.mxu0 0.0
  %291 = vmatprep.subr.mxu0 0.0
  %292 = vmatpush1.msra.mxu0 0.0
  %293 = vmatprep.subr.mxu0 0.0
  %294 = vmatpush1.msra.mxu0 0.0
  %295 = vmatprep.subr.mxu0 0.0
  %296 = vmatpush1.msra.mxu0 0.0
  %297 = vmatprep.subr.mxu0 0.0
  %298 = vmatpush1.msra.mxu0 0.0
  %299 = vmatprep.subr.mxu0 0.0
  %300 = vmatpush1.msra.mxu0 0.0
  %301 = vmatprep.subr.mxu0 0.0
  %302 = vmatpush1.msra.mxu0 0.0
  %303 = vmatprep.subr.mxu0 0.0
  %304 = vmatpush1.msra.mxu0 0.0
  %305 = vmatprep.subr.mxu0 0.0
  %306 = vmatpush1.msra.mxu0 0.0
  %307 = vmatprep.subr.mxu0 0.0
  %308 = vmatpush1.msra.mxu0 0.0
  %309 = vmatprep.subr.mxu0 0.0
  %310 = vmatpush1.msra.mxu0 0.0
  %311 = vmatprep.subr.mxu0 0.0
  %312 = vmatpush1.msra.mxu0 0.0
  %313 = vmatprep.subr.mxu0 0.0
  %314 = vmatpush1.msra.mxu0 0.0
  %315 = vmatprep.subr.mxu0 0.0
  %316 = vmatpush1.msra.mxu0 0.0
  %317 = vmatprep.subr.mxu0 0.0
  %318 = vmatpush1.msra.mxu0 0.0
  %319 = vmatprep.subr.mxu0 0.0
  %320 = vmatpush1.msra.mxu0 0.0
  %321 = vmatprep.subr.mxu0 0.0
  %322 = vmatpush1.msra.mxu0 0.0
  %323 = vmatprep.subr.mxu0 0.0
  %324 = vmatpush1.msra.mxu0 0.0
  %325 = vmatprep.subr.mxu0 0.0
  %326 = vmatpush1.msra.mxu0 0.0
  %327 = vmatprep.subr.mxu0 0.0
  %328 = vmatpush1.msra.mxu0 0.0
  %329 = vmatprep.subr.mxu0 0.0
  %330 = vmatpush1.msra.mxu0 0.0
  %331 = vmatprep.subr.mxu0 0.0
  %332 = vmatpush1.msra.mxu0 0.0
  %333 = vmatprep.subr.mxu0 0.0
  %334 = vmatpush1.msra.mxu0 0.0
  %335 = vmatprep.mubr.f32.mxu0 0.0
  %336 = vmatmul.mubr.f32.gmra.mrb[0].mxu0 %v267
  %v337 = vpop.f32.mrb[0].mxu0
  %v338 = vadd.f32 %v255, %v337
  %v339 = vpop.f32.mrb[0].mxu0
  %340 = vmatprep.mubr.f32.mxu0 0.0
  %341 = vmatmul.mubr.f32.gmra.mrb[0].mxu0 %v269
  %v342 = vpop.f32.mrb[0].mxu0
  %v343 = vadd.f32 %v263, %v342
  %v344 = vpop.f32.mrb[0].mxu0
  %345 = vdwg.mxu0
  %v348 = vcombine.high %v338, %v338
  %v350 = vunpack.c.l.s4 1983009808
  %v351 = vunpack.c.0.s8 %v350
  %v352 = vlaneseq
  %v353 = vshrl.u32 %v352, 7
  %v354 = vsub.s32 %v351, %v353
  %v355 = vrot.slane %v338, %v354
  %v357 = vunpack.c.l.s4 1983009808
  %v358 = vunpack.c.0.s8 %v357
  %v359 = vlaneseq
  %v360 = vshrl.u32 %v359, 7
  %v361 = vsub.s32 %v358, %v360
  %v362 = vrot.slane %v348, %v361
  %v363 = vcombine.high %v355, %v355
  %v364 = vcombine.high %v362, %v362
  %v366 = vunpack.c.l.s4 1983009808
  %v367 = vunpack.c.0.s8 %v366
  %v368 = vlaneseq
  %v369 = vshrl.u32 %v368, 7
  %v370 = vsub.s32 %v367, %v369
  %v371 = vrot.slane %v343, %v370
  %v372 = vcombine.high %v371, %v371
  %v379 = vmax.f32 %v355, 0.0
  %v380 = vmax.f32 %v363, 0.0
  %v381 = vmax.f32 %v362, 0.0
  %v382 = vmax.f32 %v364, 0.0
  %v383 = vmax.f32 %v371, 0.0
  %v384 = vmax.f32 %v372, 0.0
  %v387 = vlaneseq
  %v388 = vshrl.u32 %v387, 7
  %v389 = vsub.s32 0, %v388
  %v390 = vrot.slane %v379, %v389
  %v391 = vlaneseq
  %v392 = vshrl.u32 %v391, 7
  %v393 = vsub.s32 0, %v392
  %v394 = vrot.slane %v382, %v393
  %vm395 = vcmask 1041409
  %v396 = vsel %vm395, %v394, %v390
  %v398 = vlaneseq
  %v399 = vshrl.u32 %v398, 7
  %v400 = vsub.s32 1, %v399
  %v401 = vrot.slane %v379, %v400
  %v402 = vlaneseq
  %v403 = vshrl.u32 %v402, 7
  %v404 = vsub.s32 1, %v403
  %v405 = vrot.slane %v382, %v404
  %v406 = vsel %vm395, %v405, %v401
  %407 = vrot.lane.b32.xlu0 %v406, 32
  %v408 = vpop.permute.xlu0 %407
  %v412 = vlaneseq
  %v413 = vshrl.u32 %v412, 7
  %v414 = vsub.s32 0, %v413
  %v415 = vrot.slane %v380, %v414
  %v416 = vlaneseq
  %v417 = vshrl.u32 %v416, 7
  %v418 = vsub.s32 0, %v417
  %v419 = vrot.slane %v383, %v418
  %v420 = vsel %vm395, %v419, %v415
  %421 = vrot.lane.b32.xlu0 %v420, 64
  %v422 = vpop.permute.xlu0 %421
  %v424 = vlaneseq
  %v425 = vshrl.u32 %v424, 7
  %v426 = vsub.s32 1, %v425
  %v427 = vrot.slane %v380, %v426
  %v428 = vlaneseq
  %v429 = vshrl.u32 %v428, 7
  %v430 = vsub.s32 1, %v429
  %v431 = vrot.slane %v383, %v430
  %v432 = vsel %vm395, %v431, %v427
  %433 = vrot.lane.b32.xlu0 %v432, 96
  %v434 = vpop.permute.xlu0 %433
  %v438 = vlaneseq
  %v439 = vshrl.u32 %v438, 7
  %v440 = vsub.s32 0, %v439
  %v441 = vrot.slane %v381, %v440
  %v442 = vlaneseq
  %v443 = vshrl.u32 %v442, 7
  %v444 = vsub.s32 0, %v443
  %v445 = vrot.slane %v384, %v444
  %v446 = vsel %vm395, %v445, %v441
  %v448 = vlaneseq
  %v449 = vshrl.u32 %v448, 7
  %v450 = vsub.s32 1, %v449
  %v451 = vrot.slane %v381, %v450
  %v452 = vlaneseq
  %v453 = vshrl.u32 %v452, 7
  %v454 = vsub.s32 1, %v453
  %v455 = vrot.slane %v384, %v454
  %v456 = vsel %vm395, %v455, %v451
  %457 = vrot.lane.b32.xlu0 %v456, 32
  %v458 = vpop.permute.xlu0 %457
  %v460 = vsel %vm47, %v396, %v408
  %vm461 = vcmask 523264
  %v462 = vsel %vm461, %v460, %v422
  %vm463 = vcmask 785408
  %v464 = vsel %vm463, %v462, %v434
  %v465 = vsel %vm47, %v446, %v458
  %v466 = vld [vmem:[%s4] sm:$0xff]
  %v467 = vld [vmem:[%s4 + $0x8] sm:$0xff]
  %v468 = vld [vmem:[%s4 + $0x10] sm:$0xff]
  %v469 = vld [vmem:[%s4 + $0x18] sm:$0xff]
  %v470 = vld [vmem:[%s4 + $0x20] sm:$0xff]
  %v471 = vld [vmem:[%s4 + $0x28] sm:$0xff]
  %v472 = vld [vmem:[%s4 + $0x30] sm:$0xff]
  %v473 = vld [vmem:[%s4 + $0x38] sm:$0xff]
  %v474 = vld [vmem:[%s4 + $0x40] sm:$0xff]
  %v475 = vld [vmem:[%s4 + $0x48] sm:$0xff]
  %v476 = vld [vmem:[%s4 + $0x50] sm:$0xff]
  %v477 = vld [vmem:[%s4 + $0x58] sm:$0xff]
  %v478 = vld [vmem:[%s4 + $0x60] sm:$0xff]
  %v479 = vld [vmem:[%s4 + $0x68] sm:$0xff]
  %v480 = vld [vmem:[%s4 + $0x70] sm:$0xff]
  %v481 = vld [vmem:[%s4 + $0x78] sm:$0xff]
  %v482 = vld [vmem:[%s4 + $0x80] sm:$0xff]
  %v483 = vld [vmem:[%s4 + $0x88] sm:$0xff]
  %v484 = vld [vmem:[%s4 + $0x90] sm:$0xff]
  %v485 = vld [vmem:[%s4 + $0x98] sm:$0xff]
  %v486 = vld [vmem:[%s4 + $0xa0] sm:$0xff]
  %v487 = vld [vmem:[%s4 + $0xa8] sm:$0xff]
  %v488 = vld [vmem:[%s4 + $0xb0] sm:$0xff]
  %v489 = vld [vmem:[%s4 + $0xb8] sm:$0xff]
  %v490 = vld [vmem:[%s5] sm:$0x1]
  %v492 = vlaneseq
  %v493 = vshrl.u32 %v492, 7
  %v494 = vsub.s32 0, %v493
  %v495 = vrot.slane %v490, %v494
  %v498 = vsel %vm461, %v465, 0
  %500 = vmatprep.subr.mxu0 0.0
  %501 = vmatpush1.msra.mxu0 %v466
  %502 = vmatprep.subr.mxu0 0.0
  %503 = vmatpush1.msra.mxu0 %v467
  %504 = vmatprep.subr.mxu0 0.0
  %505 = vmatpush1.msra.mxu0 %v468
  %506 = vmatprep.subr.mxu0 0.0
  %507 = vmatpush1.msra.mxu0 %v469
  %508 = vmatprep.subr.mxu0 0.0
  %509 = vmatpush1.msra.mxu0 %v470
  %510 = vmatprep.subr.mxu0 0.0
  %511 = vmatpush1.msra.mxu0 %v471
  %512 = vmatprep.subr.mxu0 0.0
  %513 = vmatpush1.msra.mxu0 %v472
  %514 = vmatprep.subr.mxu0 0.0
  %515 = vmatpush1.msra.mxu0 %v473
  %516 = vmatprep.subr.mxu0 0.0
  %517 = vmatpush1.msra.mxu0 %v474
  %518 = vmatprep.subr.mxu0 0.0
  %519 = vmatpush1.msra.mxu0 %v475
  %520 = vmatprep.subr.mxu0 0.0
  %521 = vmatpush1.msra.mxu0 %v476
  %522 = vmatprep.subr.mxu0 0.0
  %523 = vmatpush1.msra.mxu0 %v477
  %524 = vmatprep.subr.mxu0 0.0
  %525 = vmatpush1.msra.mxu0 %v478
  %526 = vmatprep.subr.mxu0 0.0
  %527 = vmatpush1.msra.mxu0 %v479
  %528 = vmatprep.subr.mxu0 0.0
  %529 = vmatpush1.msra.mxu0 %v480
  %530 = vmatprep.subr.mxu0 0.0
  %531 = vmatpush1.msra.mxu0 %v481
  %532 = vmatprep.subr.mxu0 0.0
  %533 = vmatpush1.msra.mxu0 %v482
  %534 = vmatprep.subr.mxu0 0.0
  %535 = vmatpush1.msra.mxu0 %v483
  %536 = vmatprep.subr.mxu0 0.0
  %537 = vmatpush1.msra.mxu0 %v484
  %538 = vmatprep.subr.mxu0 0.0
  %539 = vmatpush1.msra.mxu0 %v485
  %540 = vmatprep.subr.mxu0 0.0
  %541 = vmatpush1.msra.mxu0 %v486
  %542 = vmatprep.subr.mxu0 0.0
  %543 = vmatpush1.msra.mxu0 %v487
  %544 = vmatprep.subr.mxu0 0.0
  %545 = vmatpush1.msra.mxu0 %v488
  %546 = vmatprep.subr.mxu0 0.0
  %547 = vmatpush1.msra.mxu0 %v489
  %548 = vmatprep.subr.mxu0 0.0
  %549 = vmatpush1.msra.mxu0 0.0
  %550 = vmatprep.subr.mxu0 0.0
  %551 = vmatpush1.msra.mxu0 0.0
  %552 = vmatprep.subr.mxu0 0.0
  %553 = vmatpush1.msra.mxu0 0.0
  %554 = vmatprep.subr.mxu0 0.0
  %555 = vmatpush1.msra.mxu0 0.0
  %556 = vmatprep.subr.mxu0 0.0
  %557 = vmatpush1.msra.mxu0 0.0
  %558 = vmatprep.subr.mxu0 0.0
  %559 = vmatpush1.msra.mxu0 0.0
  %560 = vmatprep.subr.mxu0 0.0
  %561 = vmatpush1.msra.mxu0 0.0
  %562 = vmatprep.subr.mxu0 0.0
  %563 = vmatpush1.msra.mxu0 0.0
  %564 = vmatprep.mubr.f32.mxu0 %v498
  %565 = vmatmul.mubr.f32.gmra.mrb[0].mxu0 %v464
  %v566 = vpop.f32.mrb[0].mxu0
  %v567 = vadd.f32 %v495, %v566
  %v568 = vpop.f32.mrb[0].mxu0
  %569 = vdwg.mxu0
  %v570 = vld [vmem:[%s6] sm:$0xff]
  %v571 = vld [vmem:[%s6 + $0x8] sm:$0xff]
  %v572 = vld [vmem:[%s6 + $0x10] sm:$0xff]
  %v573 = vld [vmem:[%s6 + $0x18] sm:$0xff]
  %v574 = vld [vmem:[%s7] sm:$0x1]
  %v576 = vlaneseq
  %v577 = vshrl.u32 %v576, 7
  %v578 = vsub.s32 0, %v577
  %v579 = vrot.slane %v574, %v578
  %v582 = vsel %vm47, %v567, 0
  %584 = vmatprep.subr.mxu0 0.0
  %585 = vmatpush1.msra.mxu0 %v570
  %586 = vmatprep.subr.mxu0 0.0
  %587 = vmatpush1.msra.mxu0 %v571
  %588 = vmatprep.subr.mxu0 0.0
  %589 = vmatpush1.msra.mxu0 %v572
  %590 = vmatprep.subr.mxu0 0.0
  %591 = vmatpush1.msra.mxu0 %v573
  %592 = vmatprep.subr.mxu0 0.0
  %593 = vmatpush1.msra.mxu0 0.0
  %594 = vmatprep.subr.mxu0 0.0
  %595 = vmatpush1.msra.mxu0 0.0
  %596 = vmatprep.subr.mxu0 0.0
  %597 = vmatpush1.msra.mxu0 0.0
  %598 = vmatprep.subr.mxu0 0.0
  %599 = vmatpush1.msra.mxu0 0.0
  %600 = vmatprep.subr.mxu0 0.0
  %601 = vmatpush1.msra.mxu0 0.0
  %602 = vmatprep.subr.mxu0 0.0
  %603 = vmatpush1.msra.mxu0 0.0
  %604 = vmatprep.subr.mxu0 0.0
  %605 = vmatpush1.msra.mxu0 0.0
  %606 = vmatprep.subr.mxu0 0.0
  %607 = vmatpush1.msra.mxu0 0.0
  %608 = vmatprep.subr.mxu0 0.0
  %609 = vmatpush1.msra.mxu0 0.0
  %610 = vmatprep.subr.mxu0 0.0
  %611 = vmatpush1.msra.mxu0 0.0
  %612 = vmatprep.subr.mxu0 0.0
  %613 = vmatpush1.msra.mxu0 0.0
  %614 = vmatprep.subr.mxu0 0.0
  %615 = vmatpush1.msra.mxu0 0.0
  %616 = vmatprep.subr.mxu0 0.0
  %617 = vmatpush1.msra.mxu0 0.0
  %618 = vmatprep.subr.mxu0 0.0
  %619 = vmatpush1.msra.mxu0 0.0
  %620 = vmatprep.subr.mxu0 0.0
  %621 = vmatpush1.msra.mxu0 0.0
  %622 = vmatprep.subr.mxu0 0.0
  %623 = vmatpush1.msra.mxu0 0.0
  %624 = vmatprep.subr.mxu0 0.0
  %625 = vmatpush1.msra.mxu0 0.0
  %626 = vmatprep.subr.mxu0 0.0
  %627 = vmatpush1.msra.mxu0 0.0
  %628 = vmatprep.subr.mxu0 0.0
  %629 = vmatpush1.msra.mxu0 0.0
  %630 = vmatprep.subr.mxu0 0.0
  %631 = vmatpush1.msra.mxu0 0.0
  %632 = vmatprep.subr.mxu0 0.0
  %633 = vmatpush1.msra.mxu0 0.0
  %634 = vmatprep.subr.mxu0 0.0
  %635 = vmatpush1.msra.mxu0 0.0
  %636 = vmatprep.subr.mxu0 0.0
  %637 = vmatpush1.msra.mxu0 0.0
  %638 = vmatprep.subr.mxu0 0.0
  %639 = vmatpush1.msra.mxu0 0.0
  %640 = vmatprep.subr.mxu0 0.0
  %641 = vmatpush1.msra.mxu0 0.0
  %642 = vmatprep.subr.mxu0 0.0
  %643 = vmatpush1.msra.mxu0 0.0
  %644 = vmatprep.subr.mxu0 0.0
  %645 = vmatpush1.msra.mxu0 0.0
  %646 = vmatprep.subr.mxu0 0.0
  %647 = vmatpush1.msra.mxu0 0.0
  %648 = vmatprep.mubr.f32.mxu0 0.0
  %649 = vmatmul.mubr.f32.gmra.mrb[0].mxu0 %v582
  %v650 = vpop.f32.mrb[0].mxu0
  %v651 = vadd.f32 %v579, %v650
  %v652 = vpop.f32.mrb[0].mxu0
  %653 = vdwg.mxu0
  %vm654 = vcmask 123904
  %655 = vst.msk [vmem:[%s8] sm:$0x3] %vm654, %v651
  // Predicated region
  $region34: #{encoder_forward.1} parent=0 // pred_check
    _
  $region35: #{encoder_forward.1} parent=0 // pred_check_branch
    %657 = sbr.rel (0) target = $region37
  $region36: #{encoder_forward.1} parent=0 // pred_region
    _
  $region37: #{encoder_forward.1} parent=0 // pred_fallthru
    _
  // Predicated region
  $region38: #{encoder_forward.1} parent=0 // pred_check
    _
  $region39: #{encoder_forward.1} parent=0 // pred_check_branch
    %659 = sbr.rel (0) target = $region41
  $region40: #{encoder_forward.1} parent=0 // pred_region
    _
  $region41: #{encoder_forward.1} parent=0 // pred_fallthru
    _

</llo_original>
